<compile_context>
chip_gen: v6e
topology: v6e:2x2x1
jax: 0.10.0
libtpu: 0.0.40
codegen_flags: <defaults>
</compile_context>

<pallas_src>
import jax
import jax.numpy as jnp
from jax.experimental import pallas as pl
from jax.experimental.pallas import tpu as pltpu

LANE = 128


def _softsign_kernel(re_ref, im_ref, re_out_ref, im_out_ref):
    # Elementwise softsign on the current (block_rows, lanes) VMEM tiles.
    re = re_ref[...]
    im = im_ref[...]
    re_out_ref[...] = re / (1.0 + jnp.abs(re))
    im_out_ref[...] = im / (1.0 + jnp.abs(im))


def _tuned_params():
    """Per-chip block-size / VMEM-limit tuning (see module docstring)."""
    target_elems = 512 * 1024          # 2 MiB/operand (f32): safe on v7x (64 MiB VMEM)
    vmem_limit = 32 << 20
    try:
        info = pltpu.get_tpu_info()
        if getattr(info, "vmem_capacity_bytes", 0) >= (128 << 20):
            target_elems = 1024 * 1024  # 4 MiB/operand on v5e / v6e
            vmem_limit = 48 << 20
    except Exception:
        pass                            # conservative defaults work everywhere
    return target_elems, vmem_limit


def _choose_lanes(n: int):
    """Lane width: multiple of 128 (lane-dense => unmasked vst) + padding."""
    for lanes in (4 * LANE, 2 * LANE, LANE):
        if n % lanes == 0:
            return lanes, 0
    return LANE, (-n) % LANE


def _pick_block_rows(rows: int, lanes: int, target_elems: int) -> int:
    if rows <= 8:
        return rows                     # single full-array block (bypasses (8,128) rule)
    br = max(8, (target_elems // lanes) // 8 * 8)
    # Never collapse to a 1-step grid: keep >=8 steps when rows allow
    # (>=2 otherwise) so both v7x TensorCores get work and double-buffered
    # DMA overlaps compute on every generation.
    min_steps = 8 if rows >= 64 else 2
    cap = max(8, (pl.cdiv(rows, min_steps) // 8) * 8)
    return min(br, cap, rows)


def _softsign_planes_2d(re2d: jax.Array, im2d: jax.Array):
    """Run the Pallas softsign kernel over two (rows, lanes) float32 slabs."""
    rows, lanes = re2d.shape
    target_elems, vmem_limit = _tuned_params()
    block_rows = _pick_block_rows(rows, lanes, target_elems)
    grid = (pl.cdiv(rows, block_rows),)

    spec = pl.BlockSpec((block_rows, lanes), lambda i: (i, 0))
    out_sds = jax.ShapeDtypeStruct((rows, lanes), jnp.float32)
    n_elems = rows * lanes

    return pl.pallas_call(
        _softsign_kernel,
        out_shape=(out_sds, out_sds),
        grid_spec=pltpu.PrefetchScalarGridSpec(
            num_scalar_prefetch=0,
            grid=grid,
            in_specs=[spec, spec],
            out_specs=[spec, spec],
        ),
        compiler_params=pltpu.CompilerParams(
            dimension_semantics=("parallel",),
            vmem_limit_bytes=vmem_limit,
            # Let XLA fuse the real/imag extraction (complex-input path) into
            # the Pallas input DMA instead of materializing planes in HBM.
            allow_input_fusion=[True, True],
        ),
        # Kernel-only traffic; the complex-input wrapper adds up to ~2x more
        # (the input split may fuse away, the lax.complex recombine does not).
        cost_estimate=pl.CostEstimate(
            flops=6 * n_elems,            # abs + add + div per element, 2 planes
            transcendentals=0,
            bytes_accessed=16 * n_elems,  # 2 in + 2 out, float32
        ),
    )(re2d, im2d)


def c_softsign_planar(re: jax.Array, im: jax.Array):
    """Preferred entry point: softsign on real/imag planes, no complex plumbing.

    Returns (softsign(re), softsign(im)) with the original shape, float32.
    """
    assert re.shape == im.shape, "re/im planes must have the same shape"
    orig_shape = re.shape
    re = re.astype(jnp.float32)
    im = im.astype(jnp.float32)
    n = re.size

    lanes, pad = _choose_lanes(n)
    re_f = re.reshape(-1)
    im_f = im.reshape(-1)
    if pad:
        # Only for element counts not divisible by 128 (rare for NN tensors).
        re_f = jnp.pad(re_f, (0, pad))
        im_f = jnp.pad(im_f, (0, pad))
    rows = (n + pad) // lanes
    re_o, im_o = _softsign_planes_2d(re_f.reshape(rows, lanes),
                                     im_f.reshape(rows, lanes))
    if pad:
        re_o = re_o.reshape(-1)[:n]
        im_o = im_o.reshape(-1)[:n]
    return re_o.reshape(orig_shape), im_o.reshape(orig_shape)


def c_softsign(x: jax.Array) -> jax.Array:
    """Complex softsign: softsign(Re(x)) + 1j * softsign(Im(x))  (complex64)."""
    if x.dtype == jnp.complex128:
        raise NotImplementedError(
            "c_softsign Pallas kernel supports complex64 only "
            "(TPU has no float64 vector path).")
    re_o, im_o = c_softsign_planar(jnp.real(x), jnp.imag(x))
    # NOTE: this recombine is one extra full HBM read+write pass (~16 B/elem),
    # comparable to the kernel's own traffic. Use c_softsign_planar() when the
    # surrounding code can consume planar outputs directly.
    return jax.lax.complex(re_o, im_o)


if __name__ == "__main__":
    key = jax.random.PRNGKey(0)
    k_re, k_im = jax.random.split(key)
    B, C, H, W = 2, 4, 16, 16
    x_re = jax.random.normal(k_re, (B, C, H, W), dtype=jnp.float32)
    x_im = jax.random.normal(k_im, (B, C, H, W), dtype=jnp.float32)
    x = jax.lax.complex(x_re, x_im)

    out = c_softsign(x)
    jax.block_until_ready(out)

    # Reference (pure JAX): softsign applied to real/imag parts separately.
    ref = jax.lax.complex(x_re / (1.0 + jnp.abs(x_re)),
                          x_im / (1.0 + jnp.abs(x_im)))
    assert out.shape == x.shape and out.dtype == jnp.complex64
    assert jnp.allclose(out, ref, atol=1e-6), "mismatch vs reference"

    print("KERNEL_OK")
</pallas_src>

<mosaic_0001>
module attributes {stable_mosaic.version = 11 : i64} {
  func.func @_softsign_kernel(%arg0: i32, %arg1: memref<4x512xf32, #tpu.memory_space<vmem>>, %arg2: memref<4x512xf32, #tpu.memory_space<vmem>>, %arg3: memref<4x512xf32, #tpu.memory_space<vmem>>, %arg4: memref<4x512xf32, #tpu.memory_space<vmem>>) attributes {dimension_semantics = [#tpu.dimension_semantics<parallel>], iteration_bounds = array<i64: 1>, scalar_prefetch = 0 : i64, scratch_operands = 0 : i64, tpu.core_type = #tpu.core_type<tc>, window_params = [{transform_indices = @transform_0, window_bounds = array<i64: 4, 512>}, {transform_indices = @transform_1, window_bounds = array<i64: 4, 512>}, {transform_indices = @transform_2, window_bounds = array<i64: 4, 512>}, {transform_indices = @transform_3, window_bounds = array<i64: 4, 512>}]} {
    %c0 = arith.constant 0 : index
    %c0_0 = arith.constant 0 : index
    %0 = vector.load %arg1[%c0, %c0_0] : memref<4x512xf32, #tpu.memory_space<vmem>>, vector<4x512xf32>
    %c0_1 = arith.constant 0 : index
    %c0_2 = arith.constant 0 : index
    %1 = vector.load %arg2[%c0_1, %c0_2] : memref<4x512xf32, #tpu.memory_space<vmem>>, vector<4x512xf32>
    %2 = math.absf %0 : vector<4x512xf32>
    %cst = arith.constant 1.000000e+00 : f32
    %3 = vector.broadcast %cst : f32 to vector<4x512xf32>
    %4 = arith.addf %3, %2 : vector<4x512xf32>
    %5 = arith.divf %0, %4 : vector<4x512xf32>
    %c0_3 = arith.constant 0 : index
    %c0_4 = arith.constant 0 : index
    %6 = vector.load %arg3[%c0_3, %c0_4] : memref<4x512xf32, #tpu.memory_space<vmem>>, vector<4x512xf32>
    tpu.vector_store %arg3[%c0_3, %c0_4], %5 {strides = array<i32>} : memref<4x512xf32, #tpu.memory_space<vmem>>, vector<4x512xf32>,
    %7 = math.absf %1 : vector<4x512xf32>
    %cst_5 = arith.constant 1.000000e+00 : f32
    %8 = vector.broadcast %cst_5 : f32 to vector<4x512xf32>
    %9 = arith.addf %8, %7 : vector<4x512xf32>
    %10 = arith.divf %1, %9 : vector<4x512xf32>
    %c0_6 = arith.constant 0 : index
    %c0_7 = arith.constant 0 : index
    %11 = vector.load %arg4[%c0_6, %c0_7] : memref<4x512xf32, #tpu.memory_space<vmem>>, vector<4x512xf32>
    tpu.vector_store %arg4[%c0_6, %c0_7], %10 {strides = array<i32>} : memref<4x512xf32, #tpu.memory_space<vmem>>, vector<4x512xf32>,
    return
  }
  func.func @transform_0(%arg0: i32) -> (i32, i32) {
    %c0_i32 = arith.constant 0 : i32
    %c0_i32_0 = arith.constant 0 : i32
    return %arg0, %c0_i32 : i32, i32
  }
  func.func @transform_1(%arg0: i32) -> (i32, i32) {
    %c0_i32 = arith.constant 0 : i32
    %c0_i32_0 = arith.constant 0 : i32
    return %arg0, %c0_i32 : i32, i32
  }
  func.func @transform_2(%arg0: i32) -> (i32, i32) {
    %c0_i32 = arith.constant 0 : i32
    %c0_i32_0 = arith.constant 0 : i32
    return %arg0, %c0_i32 : i32, i32
  }
  func.func @transform_3(%arg0: i32) -> (i32, i32) {
    %c0_i32 = arith.constant 0 : i32
    %c0_i32_0 = arith.constant 0 : i32
    return %arg0, %c0_i32 : i32, i32
  }
}

</mosaic_0001>

<llo_original>
// kernel: tpu_custom_call.1
$region0: #{tpu_custom_call.1}
  #allocation0 [shape = 'u32[]', space=smem, size = 0x4, offset = 0x4, fixed_abs, tag = 'smem constant byte address 0x4 - core index']
  #allocation1 [shape = 'u32[144,128]{1,0:T(1,128)}', space=vmem, size = 0x12000, scoped, tag = 'internal scratch']
  %s0 = inlined_call_operand.hbm [shape: f32[4,512], index: 0, kind: input, shape index: {}]
  %s1 = inlined_call_operand.hbm [shape: f32[4,512], index: 1, kind: input, shape index: {}]
  %s2 = inlined_call_operand.hbm [shape: f32[4,512], index: 2, kind: output, shape index: {0}]
  %s3 = inlined_call_operand.hbm [shape: f32[4,512], index: 3, kind: output, shape index: {1}]
  %4 = xla_tuple %s2, %s3
  %s5 = sld [smem:[#allocation0]]
  $region34: #{tpu_custom_call.1} parent=0
    _
  %s7 = ssub.s32 1, %s5
  %s8 = scalar_select 0, %s7, %s5
  $region1: #{tpu_custom_call.1} parent=0
    #allocation2 [shape = 'u8[8192]{0}', space=vmem, size = 0x2000, scoped, tag = 'input window, operand 0, single buffered']
    #allocation3 [shape = 's32[1]{0}', space=sflag, size = 0x4, scoped, tag = 'scoped memory for tpu_custom_call.1']
    #allocation4 [shape = 's32[1]{0}', space=sflag, size = 0x4, scoped, tag = 'scoped memory for tpu_custom_call.1']
    #allocation5 [shape = 'u8[8192]{0}', space=vmem, size = 0x2000, scoped, tag = 'input window, operand 1, single buffered']
    #allocation6 [shape = 's32[1]{0}', space=sflag, size = 0x4, scoped, tag = 'scoped memory for tpu_custom_call.1']
    #allocation7 [shape = 'u8[8192]{0}', space=vmem, size = 0x2000, scoped, tag = 'output window, operand 0, single buffered']
    #allocation8 [shape = 'u8[8192]{0}', space=vmem, size = 0x2000, scoped, tag = 'output window, operand 1, single buffered']
    #allocation9 [shape = 's32[1]{0}', space=sflag, size = 0x4, scoped, tag = 'scoped memory for tpu_custom_call.1']
    %9 = vsyncpa [#allocation3], 0
    %10 = vsyncpa [#allocation6], 0
    %11 = vsyncpa [#allocation4], 0
    %12 = vsyncpa [#allocation9], 0
    // Predicated region
    $region2: #{tpu_custom_call.1} parent=1 // pred_check
      _
    $region3: #{tpu_custom_call.1} parent=1 // pred_check_branch
      %14 = sbr.rel (0) target = $region5
    $region4: #{tpu_custom_call.1} parent=1 // pred_region
      %s16 = ssub.s32 256, 256
      %17 = vsyncadd [#allocation3], %s16
      %s19 = sshll.u32 [#allocation2], 4
      %s20 = int_to_ptr.vmem [resolvable:$true] %s19
      %22 = dma.hbm_to_vmem [thread:$0]  %s0, 256, %s20, [#allocation3]
    $region5: #{tpu_custom_call.1} parent=1 // pred_fallthru
      _
    // Predicated region
    $region6: #{tpu_custom_call.1} parent=1 // pred_check
      _
    $region7: #{tpu_custom_call.1} parent=1 // pred_check_branch
      %24 = sbr.rel (0) target = $region9
    $region8: #{tpu_custom_call.1} parent=1 // pred_region
      %s26 = ssub.s32 256, 256
      %27 = vsyncadd [#allocation6], %s26
      %s29 = sshll.u32 [#allocation5], 4
      %s30 = int_to_ptr.vmem [resolvable:$true] %s29
      %32 = dma.hbm_to_vmem [thread:$0]  %s1, 256, %s30, [#allocation6]
    $region9: #{tpu_custom_call.1} parent=1 // pred_fallthru
      _
    // Predicated region
    $region10: #{tpu_custom_call.1} parent=1 // pred_check
      _
    $region11: #{tpu_custom_call.1} parent=1 // pred_check_branch
      %34 = sbr.rel (0) target = $region13
    $region12: #{tpu_custom_call.1} parent=1 // pred_region
      %35 = dma.done [#allocation3], 256
    $region13: #{tpu_custom_call.1} parent=1 // pred_fallthru
      _
    // Predicated region
    $region14: #{tpu_custom_call.1} parent=1 // pred_check
      _
    $region15: #{tpu_custom_call.1} parent=1 // pred_check_branch
      %37 = sbr.rel (0) target = $region17
    $region16: #{tpu_custom_call.1} parent=1 // pred_region
      %38 = dma.done [#allocation6], 256
    $region17: #{tpu_custom_call.1} parent=1 // pred_fallthru
      _
    %v39 = vld [vmem:[#allocation2] sm:$0xff]
    %v40 = vld [vmem:[#allocation2 + $0x8] sm:$0xff]
    %v41 = vld [vmem:[#allocation5] sm:$0xff]
    %v42 = vld [vmem:[#allocation5 + $0x8] sm:$0xff]
    %v43 = vand.u32 2147483647, %v39
    %v44 = vand.u32 2147483647, %v40
    %v45 = vadd.f32 %v43, 1.0
    %v46 = vadd.f32 %v44, 1.0
    %v47 = vrcp.pop %v45
    %v48 = vmul.f32 %v39, %v47
    %v49 = vrcp.pop %v46
    %v50 = vmul.f32 %v40, %v49
    %51 = vst [vmem:[#allocation7] sm:$0xff] %v48
    %52 = vst [vmem:[#allocation7 + $0x8] sm:$0xff] %v50
    %v53 = vand.u32 2147483647, %v41
    %v54 = vand.u32 2147483647, %v42
    %v55 = vadd.f32 %v53, 1.0
    %v56 = vadd.f32 %v54, 1.0
    %v57 = vrcp.pop %v55
    %v58 = vmul.f32 %v41, %v57
    %v59 = vrcp.pop %v56
    %v60 = vmul.f32 %v42, %v59
    %61 = vst [vmem:[#allocation8] sm:$0xff] %v58
    %62 = vst [vmem:[#allocation8 + $0x8] sm:$0xff] %v60
    // Predicated region
    $region18: #{tpu_custom_call.1} parent=1 // pred_check
      _
    $region19: #{tpu_custom_call.1} parent=1 // pred_check_branch
      %64 = sbr.rel (0) target = $region21
    $region20: #{tpu_custom_call.1} parent=1 // pred_region
      %s66 = ssub.s32 256, 256
      %67 = vsyncadd [#allocation4], %s66
      %s69 = sshll.u32 [#allocation7], 4
      %s70 = int_to_ptr.vmem [resolvable:$true] %s69
      %72 = dma.vmem_to_hbm [thread:$0]  %s70, 256, %s2, [#allocation4]
    $region21: #{tpu_custom_call.1} parent=1 // pred_fallthru
      _
    // Predicated region
    $region22: #{tpu_custom_call.1} parent=1 // pred_check
      _
    $region23: #{tpu_custom_call.1} parent=1 // pred_check_branch
      %74 = sbr.rel (0) target = $region25
    $region24: #{tpu_custom_call.1} parent=1 // pred_region
      %s76 = ssub.s32 256, 256
      %77 = vsyncadd [#allocation9], %s76
      %s79 = sshll.u32 [#allocation8], 4
      %s80 = int_to_ptr.vmem [resolvable:$true] %s79
      %82 = dma.vmem_to_hbm [thread:$0]  %s80, 256, %s3, [#allocation9]
    $region25: #{tpu_custom_call.1} parent=1 // pred_fallthru
      _
    // Predicated region
    $region26: #{tpu_custom_call.1} parent=1 // pred_check
      _
    $region27: #{tpu_custom_call.1} parent=1 // pred_check_branch
      %84 = sbr.rel (0) target = $region29
    $region28: #{tpu_custom_call.1} parent=1 // pred_region
      %85 = dma.done [#allocation4], 256
    $region29: #{tpu_custom_call.1} parent=1 // pred_fallthru
      _
    // Predicated region
    $region30: #{tpu_custom_call.1} parent=1 // pred_check
      _
    $region31: #{tpu_custom_call.1} parent=1 // pred_check_branch
      %87 = sbr.rel (0) target = $region33
    $region32: #{tpu_custom_call.1} parent=1 // pred_region
      %88 = dma.done [#allocation9], 256
    $region33: #{tpu_custom_call.1} parent=1 // pred_fallthru
      _
    %89 = vsyncpa [#allocation3], 1
    %90 = vsyncpa [#allocation6], 1
    %91 = vsyncpa [#allocation4], 1
    %92 = vsyncpa [#allocation9], 1

</llo_original>
